<compile_context>
chip_gen: v7x
topology: tpu7x:2x2x1
jax: 0.10.0
libtpu: 0.0.40
codegen_flags: <defaults>
</compile_context>

<pallas_src>
import jax
import jax.numpy as jnp
import numpy as np
from jax.experimental import pallas as pl
from jax.experimental.pallas import tpu as pltpu

NODE, GRAPH, EDGE = 0, 1, 2     # ModelTaskLevel.{node, graph, edge}
F_PAD = 128                     # lane-dense padding of the scalar output dim


# ------------------------------ sizing helpers -------------------------------
def _round_up(x, m):
    return ((x + m - 1) // m) * m


def _vmem_capacity():
    try:
        info = pltpu.get_tpu_info()
        cap = getattr(info, "vmem_capacity_bytes", None)
        if cap:
            return int(cap)
    except Exception:
        pass
    return 64 << 20      # conservative default (v7x per-TensorCore)


def _vmem_limit(*buf_bytes):
    cap = _vmem_capacity()
    need = int(sum(buf_bytes)) + (4 << 20)           # tiles + headroom
    return int(min(max(need, 16 << 20), int(cap * 0.9)))


def derive_tm(n, *, hid_pad=128, target=512):
    """Row tile (the main tuning knob): largest multiple-of-128 tile <= target
    such that the double-buffered bf16 A_hat row tile + resident xw/h1 block +
    the output double buffer fit ~45% of this generation's VMEM."""
    cap = _vmem_capacity()
    n_lane = max(_round_up(n, 128), 128)
    resident = 2 * n_lane * hid_pad * 2              # xw / h1 resident (x2 safety)
    budget = int(cap * 0.45) - resident
    per_row = 2 * n_lane * 2 + 2 * F_PAD * 4 + 2 * hid_pad * 2
    tm = max(8, min(target, (budget // per_row) if budget > 0 else 8, n_lane))
    if tm >= 128:
        tm = (tm // 128) * 128
    else:                                            # 8/16/32/64 (divides 128)
        tm = 8 << int(np.log2(max(tm // 8, 1)))
    return int(tm)


def _pick_tn(p, cap=4096):
    """Reduction (column) tile for the readout kernels: multiple of 128, <= cap,
    dividing P exactly so no garbage-padded partial block feeds the sum."""
    tn = max(128, min(p, cap) // 128 * 128)
    while p % tn:
        tn -= 128
    return int(tn)


def prepare_gcn(a_hat, *, tm=None):
    """One-time bf16 cast + zero padding of A_hat (build once, reuse across
    calls/modes so A_hat is never re-read in f32)."""
    n = a_hat.shape[0]
    if tm is None:
        tm = derive_tm(n)
    p = _round_up(n, max(tm, 128))
    if p // tm == 1 and p >= 256:        # give v7x's 2nd TensorCore a tile
        tm = p // 2
    a_bf = jnp.zeros((p, p), jnp.bfloat16).at[:n, :n].set(
        a_hat.astype(jnp.bfloat16))
    return a_bf, int(tm), int(p)


# --------------------------------- kernels -----------------------------------
def layer1_kernel(a_ref, xw_ref, b1_ref, h_ref):
    """h1[rows] = relu(A_hat[rows, :] @ xw + b1);  xw = x @ w1 is precomputed."""
    h = jnp.dot(a_ref[...], xw_ref[...],
                preferred_element_type=jnp.float32) + b1_ref[...]
    h_ref[...] = jnp.maximum(h, 0.0).astype(h_ref.dtype)


def layer2_node_kernel(a_ref, h_ref, w2_ref, b2_ref, o_ref):
    """out[rows] = (A_hat[rows, :] @ h1) @ w2_pad + b2_pad   (node task)."""
    ah = jnp.dot(a_ref[...], h_ref[...], preferred_element_type=jnp.float32)
    o_ref[...] = jnp.dot(ah.astype(jnp.bfloat16), w2_ref[...],
                         preferred_element_type=jnp.float32) + b2_ref[...]


def readout_graph_kernel(q_ref, h_ref, w2_ref, b2_ref, cnt_ref, o_ref, acc_ref):
    """Tiled reduction over N: acc += q[:, jT] @ h1[jT]; finalize w/ w2, cnt*b2."""
    j = pl.program_id(0)

    @pl.when(j == 0)
    def _():
        acc_ref[...] = jnp.zeros_like(acc_ref)

    acc_ref[...] += jnp.dot(q_ref[...], h_ref[...],
                            preferred_element_type=jnp.float32)

    @pl.when(j == pl.num_programs(0) - 1)
    def _():
        o_ref[...] = (jnp.dot(acc_ref[...].astype(jnp.bfloat16), w2_ref[...],
                              preferred_element_type=jnp.float32)
                      + cnt_ref[...] * b2_ref[...])


def readout_edge_kernel(q_ref, h_ref, w2_ref, b2_ref, o_ref, acc_ref):
    """q packs [q0; q1] -> one propagation matmul; split & multiply at the end."""
    j = pl.program_id(0)

    @pl.when(j == 0)
    def _():
        acc_ref[...] = jnp.zeros_like(acc_ref)

    acc_ref[...] += jnp.dot(q_ref[...], h_ref[...],
                            preferred_element_type=jnp.float32)

    @pl.when(j == pl.num_programs(0) - 1)
    def _():
        y = (jnp.dot(acc_ref[...].astype(jnp.bfloat16), w2_ref[...],
                     preferred_element_type=jnp.float32) + b2_ref[...])
        kp = y.shape[0] // 2
        o_ref[...] = y[:kp] * y[kp:]


# -------------------------------- wrappers ------------------------------------
def gcn_layer1(a_bf, xw_bf, b1p, *, tm):
    p, hid_pad = xw_bf.shape
    vmem = _vmem_limit(2 * tm * p * 2, 2 * p * hid_pad * 2, 2 * tm * hid_pad * 2)
    return pl.pallas_call(
        layer1_kernel,
        out_shape=jax.ShapeDtypeStruct((p, hid_pad), jnp.bfloat16),
        grid=(p // tm,),
        in_specs=[
            pl.BlockSpec((tm, p), lambda i: (i, 0)),          # A_hat row tile
            pl.BlockSpec((p, hid_pad), lambda i: (0, 0)),     # xw (resident)
            pl.BlockSpec((1, hid_pad), lambda i: (0, 0)),     # b1
        ],
        out_specs=pl.BlockSpec((tm, hid_pad), lambda i: (i, 0)),
        compiler_params=pltpu.CompilerParams(
            dimension_semantics=("parallel",), vmem_limit_bytes=vmem),
    )(a_bf, xw_bf, b1p)


def gcn_layer2_node(a_bf, h1, w2p, b2p, *, tm):
    p, hid_pad = h1.shape
    vmem = _vmem_limit(2 * tm * p * 2, 2 * p * hid_pad * 2, 2 * tm * F_PAD * 4)
    return pl.pallas_call(
        layer2_node_kernel,
        out_shape=jax.ShapeDtypeStruct((p, F_PAD), jnp.float32),
        grid=(p // tm,),
        in_specs=[
            pl.BlockSpec((tm, p), lambda i: (i, 0)),          # A_hat row tile
            pl.BlockSpec((p, hid_pad), lambda i: (0, 0)),     # h1 (resident)
            pl.BlockSpec((hid_pad, F_PAD), lambda i: (0, 0)), # w2 (lane-padded)
            pl.BlockSpec((1, F_PAD), lambda i: (0, 0)),       # b2 (lane-padded)
        ],
        out_specs=pl.BlockSpec((tm, F_PAD), lambda i: (i, 0)),
        compiler_params=pltpu.CompilerParams(
            dimension_semantics=("parallel",), vmem_limit_bytes=vmem),
    )(a_bf, h1, w2p, b2p)


def gcn_readout_graph(q, cnt, h1, w2p, b2p, *, tn):
    rows, p = q.shape
    hid_pad = h1.shape[1]
    vmem = _vmem_limit(2 * rows * tn * 2, 2 * tn * hid_pad * 2,
                       rows * hid_pad * 4)
    return pl.pallas_call(
        readout_graph_kernel,
        out_shape=jax.ShapeDtypeStruct((rows, F_PAD), jnp.float32),
        grid=(p // tn,),
        in_specs=[
            pl.BlockSpec((rows, tn), lambda j: (0, j)),        # q column tile
            pl.BlockSpec((tn, hid_pad), lambda j: (j, 0)),     # h1 row tile
            pl.BlockSpec((hid_pad, F_PAD), lambda j: (0, 0)),  # w2
            pl.BlockSpec((1, F_PAD), lambda j: (0, 0)),        # b2
            pl.BlockSpec((rows, 1), lambda j: (0, 0)),         # graph node counts
        ],
        out_specs=pl.BlockSpec((rows, F_PAD), lambda j: (0, 0)),
        scratch_shapes=[pltpu.VMEM((rows, hid_pad), jnp.float32)],
        compiler_params=pltpu.CompilerParams(
            dimension_semantics=("arbitrary",), vmem_limit_bytes=vmem),
    )(q, h1, w2p, b2p, cnt)


def gcn_readout_edge(q, h1, w2p, b2p, *, tn):
    rows, p = q.shape           # rows = 2 * k_pad
    hid_pad = h1.shape[1]
    vmem = _vmem_limit(2 * rows * tn * 2, 2 * tn * hid_pad * 2,
                       rows * hid_pad * 4)
    return pl.pallas_call(
        readout_edge_kernel,
        out_shape=jax.ShapeDtypeStruct((rows // 2, F_PAD), jnp.float32),
        grid=(p // tn,),
        in_specs=[
            pl.BlockSpec((rows, tn), lambda j: (0, j)),        # [q0; q1] tile
            pl.BlockSpec((tn, hid_pad), lambda j: (j, 0)),     # h1 row tile
            pl.BlockSpec((hid_pad, F_PAD), lambda j: (0, 0)),  # w2
            pl.BlockSpec((1, F_PAD), lambda j: (0, 0)),        # b2
        ],
        out_specs=pl.BlockSpec((rows // 2, F_PAD), lambda j: (0, 0)),
        scratch_shapes=[pltpu.VMEM((rows, hid_pad), jnp.float32)],
        compiler_params=pltpu.CompilerParams(
            dimension_semantics=("arbitrary",), vmem_limit_bytes=vmem),
    )(q, h1, w2p, b2p)


def gcn_forward(x, a_hat, w1, b1, w2, b2, *, mode, batch=None, num_graphs=None,
                edge_label_index=None, tm=None, prep=None):
    """Full GCN forward. `mode` is a Python int -> per-mode kernels specialized
    at trace time.  `prep` (from prepare_gcn) reuses the one-time bf16 A_hat."""
    bf = jnp.bfloat16
    n = x.shape[0]
    f_hid = w1.shape[1]
    f_out = w2.shape[1]
    hid_pad = max(_round_up(f_hid, 128), 128)

    if prep is None:
        prep = prepare_gcn(a_hat, tm=tm)
    a_bf, tm, p = prep
    tn = _pick_tn(p)

    # hoisted xw = x @ w1 (bf16 operands, f32 accum), row/lane zero-padded
    xw = jnp.dot(x.astype(bf), w1.astype(bf), preferred_element_type=jnp.float32)
    xw_bf = jnp.zeros((p, hid_pad), bf).at[:n, :f_hid].set(xw.astype(bf))
    b1p = jnp.zeros((1, hid_pad), jnp.float32).at[:, :f_hid].set(
        b1.astype(jnp.float32))
    w2p = jnp.zeros((hid_pad, F_PAD), bf).at[:f_hid, :f_out].set(w2.astype(bf))
    b2p = jnp.zeros((1, F_PAD), jnp.float32).at[:, :f_out].set(
        b2.astype(jnp.float32))

    h1 = gcn_layer1(a_bf, xw_bf, b1p, tm=tm)

    if mode == NODE:
        out = gcn_layer2_node(a_bf, h1, w2p, b2p, tm=tm)
        return out[:n, :f_out]

    if mode == GRAPH:
        assert batch is not None
        ng = int(num_graphs) if num_graphs is not None else int(batch.max()) + 1
        ngp = max(_round_up(ng, 8), 8)
        # folded readout built from the bf16 copy (no extra f32 pass over A_hat)
        # TODO(synk): for very large per-graph node counts accumulate q in f32
        # (or emit q as a second output of layer1) to avoid bf16 summation error.
        q_seg = jax.ops.segment_sum(a_bf[:n], batch, num_segments=ng)
        q = jnp.zeros((ngp, p), bf).at[:ng].set(q_seg)
        cnt = jnp.zeros((ngp, 1), jnp.float32).at[batch, 0].add(1.0)
        out = gcn_readout_graph(q, cnt, h1, w2p, b2p, tn=tn)
        return out[:ng, :f_out]

    if mode == EDGE:
        assert edge_label_index is not None
        eli0, eli1 = edge_label_index[0], edge_label_index[1]
        k = int(eli0.shape[0])
        kp = max(_round_up(k, 8), 8)
        # pack both endpoint selectors into one operand -> single propagation
        q = jnp.zeros((2 * kp, p), bf)
        q = q.at[:k].set(a_bf[eli0]).at[kp:kp + k].set(a_bf[eli1])
        out = gcn_readout_edge(q, h1, w2p, b2p, tn=tn)
        return out[:k, :f_out]

    raise ValueError(f"unknown mode {mode}")


# -------------------------------- JAX glue ------------------------------------
def build_a_hat(edge_index, num_nodes):
    # D^-1/2 (A + I) D^-1/2   (add_self_loops=True).  NOTE: duplicate edges in
    # edge_index would get weight > 1 (PyG's gcn_norm assumes no duplicates).
    src, dst = edge_index
    a = jnp.zeros((num_nodes, num_nodes), jnp.float32)
    a = a.at[dst, src].add(1.0)                 # messages flow src -> dst
    a = a + jnp.eye(num_nodes, dtype=jnp.float32)
    deg = a.sum(axis=1)
    dinv = jnp.where(deg > 0, deg ** -0.5, 0.0)
    return dinv[:, None] * a * dinv[None, :]


def reference_f32(x, a_hat, w1, b1, w2, b2, mode, batch, num_graphs, eli):
    """The original module math in f32 (unfused readout)."""
    h = jnp.maximum(a_hat @ (x @ w1) + b1, 0.0)
    h = a_hat @ (h @ w2) + b2
    if mode == GRAPH:
        return jax.ops.segment_sum(h, batch, num_segments=num_graphs)
    if mode == EDGE:
        return h[eli[0]] * h[eli[1]]
    return h


def reference_bf16(x, a_hat, w1, b1, w2, b2, mode, batch, num_graphs, eli):
    """Mirrors the kernel numerics (bf16 operands, f32 accum, folded readout,
    hoisted xw, bf16 segment-sum)."""
    bf = jnp.bfloat16
    a_bf = a_hat.astype(bf)
    xw = jnp.dot(x.astype(bf), w1.astype(bf),
                 preferred_element_type=jnp.float32).astype(bf)
    h1 = jnp.maximum(
        jnp.dot(a_bf, xw, preferred_element_type=jnp.float32) + b1, 0.0
    ).astype(bf)

    def head(q_bf):
        s = jnp.dot(q_bf, h1, preferred_element_type=jnp.float32)
        return jnp.dot(s.astype(bf), w2.astype(bf),
                       preferred_element_type=jnp.float32)

    if mode == NODE:
        return head(a_bf) + b2
    if mode == GRAPH:
        q = jax.ops.segment_sum(a_bf, batch, num_segments=num_graphs)
        cnt = jax.ops.segment_sum(jnp.ones((a_hat.shape[0], 1), jnp.float32),
                                  batch, num_segments=num_graphs)
        return head(q) + cnt * b2
    return (head(a_bf[eli[0]]) + b2) * (head(a_bf[eli[1]]) + b2)


if __name__ == "__main__":
    # ----- data from the test -----
    batch = jnp.array([0, 0, 0, 1, 1, 2, 2, 2], jnp.int32)
    edge_index = jnp.array(
        [[0, 1, 1, 2, 2, 3, 3, 4, 4, 5, 5, 6, 6, 7],
         [1, 0, 2, 1, 3, 2, 4, 3, 5, 4, 6, 5, 7, 6]], jnp.int32)
    edge_label_index = jnp.array([[0, 1, 2], [3, 4, 5]], jnp.int32)

    N, F_IN, F_HID, F_OUT = 8, 3, 16, 1
    NUM_GRAPHS = 3                     # static; avoids host sync on batch.max()
    key = jax.random.PRNGKey(0)
    kx, k1, k2, kb1, kb2 = jax.random.split(key, 5)
    x = jax.random.normal(kx, (N, F_IN), jnp.float32)
    w1 = jax.random.normal(k1, (F_IN, F_HID), jnp.float32) / np.sqrt(F_IN)
    b1 = 0.1 * jax.random.normal(kb1, (1, F_HID), jnp.float32)
    w2 = jax.random.normal(k2, (F_HID, F_OUT), jnp.float32) / np.sqrt(F_HID)
    b2 = 0.1 * jax.random.normal(kb2, (1, F_OUT), jnp.float32)

    a_hat = build_a_hat(edge_index, N)
    prep = prepare_gcn(a_hat)          # one-time bf16 cast / padding of A_hat

    for name, mode in (("node", NODE), ("graph", GRAPH), ("edge", EDGE)):
        out = gcn_forward(x, a_hat, w1, b1, w2, b2, mode=mode,
                          batch=batch, num_graphs=NUM_GRAPHS,
                          edge_label_index=edge_label_index, prep=prep)
        out = jax.block_until_ready(out)

        # strict: vs a JAX reference with identical bf16/f32 numerics
        ref_bf = reference_bf16(x, a_hat, w1, b1, w2, b2, mode,
                                batch, NUM_GRAPHS, edge_label_index)
        np.testing.assert_allclose(np.asarray(out), np.asarray(ref_bf),
                                   rtol=2e-3, atol=2e-3,
                                   err_msg=f"{name}: mismatch vs bf16 reference")

        # loose: vs the f32 module math (bf16 quantization tolerance) — checks
        # the folded readout preserves the module's forward semantics.
        ref32 = reference_f32(x, a_hat, w1, b1, w2, b2, mode,
                              batch, NUM_GRAPHS, edge_label_index)
        np.testing.assert_allclose(np.asarray(out), np.asarray(ref32),
                                   rtol=5e-2, atol=5e-2,
                                   err_msg=f"{name}: mismatch vs f32 reference")

    print("KERNEL_OK")
</pallas_src>

<mosaic_0001>
module attributes {stable_mosaic.version = 11 : i64} {
  func.func @layer1_kernel(%arg0: i32, %arg1: memref<128x128xbf16, #tpu.memory_space<vmem>>, %arg2: memref<128x128xbf16, #tpu.memory_space<vmem>>, %arg3: memref<1x128xf32, #tpu.memory_space<vmem>>, %arg4: memref<128x128xbf16, #tpu.memory_space<vmem>>) attributes {dimension_semantics = [#tpu.dimension_semantics<parallel>], iteration_bounds = array<i64: 1>, scalar_prefetch = 0 : i64, scratch_operands = 0 : i64, tpu.core_type = #tpu.core_type<tc>, window_params = [{transform_indices = @transform_0, window_bounds = array<i64: 128, 128>}, {pipeline_mode = #tpu.pipeline_mode<synchronous>, transform_indices = @transform_1, window_bounds = array<i64: 128, 128>}, {pipeline_mode = #tpu.pipeline_mode<synchronous>, transform_indices = @transform_2, window_bounds = array<i64: 1, 128>}, {transform_indices = @transform_3, window_bounds = array<i64: 128, 128>}]} {
    %c0 = arith.constant 0 : index
    %c0_0 = arith.constant 0 : index
    %0 = vector.load %arg1[%c0, %c0_0] : memref<128x128xbf16, #tpu.memory_space<vmem>>, vector<128x128xbf16>
    %c0_1 = arith.constant 0 : index
    %c0_2 = arith.constant 0 : index
    %1 = vector.load %arg2[%c0_1, %c0_2] : memref<128x128xbf16, #tpu.memory_space<vmem>>, vector<128x128xbf16>
    %cst = arith.constant dense<0.000000e+00> : vector<128x128xf32>
    %2 = tpu.matmul %0, %1, %cst {dimension_numbers = #tpu.dot_dimension_numbers<[1], [0], [0], [1], [0, 0, 1, 1], [], []>} : vector<128x128xbf16>, vector<128x128xbf16>, vector<128x128xf32> -> vector<128x128xf32>
    %c0_3 = arith.constant 0 : index
    %c0_4 = arith.constant 0 : index
    %3 = vector.load %arg3[%c0_3, %c0_4] : memref<1x128xf32, #tpu.memory_space<vmem>>, vector<1x128xf32>
    %4 = vector.broadcast %3 : vector<1x128xf32> to vector<128x128xf32>
    %5 = arith.addf %2, %4 : vector<128x128xf32>
    %cst_5 = arith.constant 0.000000e+00 : f32
    %6 = vector.broadcast %cst_5 : f32 to vector<128x128xf32>
    %7 = arith.maximumf %5, %6 : vector<128x128xf32>
    %8 = arith.truncf %7 : vector<128x128xf32> to vector<128x128xbf16>
    %c0_6 = arith.constant 0 : index
    %c0_7 = arith.constant 0 : index
    %9 = vector.load %arg4[%c0_6, %c0_7] : memref<128x128xbf16, #tpu.memory_space<vmem>>, vector<128x128xbf16>
    tpu.vector_store %arg4[%c0_6, %c0_7], %8 {strides = array<i32>} : memref<128x128xbf16, #tpu.memory_space<vmem>>, vector<128x128xbf16>,
    return
  }
  func.func @transform_0(%arg0: i32) -> (i32, i32) {
    %c0_i32 = arith.constant 0 : i32
    %c0_i32_0 = arith.constant 0 : i32
    return %arg0, %c0_i32 : i32, i32
  }
  func.func @transform_1(%arg0: i32) -> (i32, i32) {
    %c0_i32 = arith.constant 0 : i32
    %c0_i32_0 = arith.constant 0 : i32
    %c0_i32_1 = arith.constant 0 : i32
    return %c0_i32, %c0_i32_0 : i32, i32
  }
  func.func @transform_2(%arg0: i32) -> (i32, i32) {
    %c0_i32 = arith.constant 0 : i32
    %c0_i32_0 = arith.constant 0 : i32
    %c0_i32_1 = arith.constant 0 : i32
    return %c0_i32, %c0_i32_0 : i32, i32
  }
  func.func @transform_3(%arg0: i32) -> (i32, i32) {
    %c0_i32 = arith.constant 0 : i32
    %c0_i32_0 = arith.constant 0 : i32
    return %arg0, %c0_i32 : i32, i32
  }
}

</mosaic_0001>

<llo_original>
// kernel: tpu_custom_call.1
$region0: #{tpu_custom_call.1}
  #allocation0 [shape = 'u32[]', space=smem, size = 0x4, offset = 0x4, fixed_abs, tag = 'smem constant byte address 0x4 - core index']
  #allocation1 [shape = 'u32[144,128]{1,0:T(1,128)}', space=vmem, size = 0x12000, scoped, tag = 'internal scratch']
  %s0 = inlined_call_operand.hbm [shape: bf16[128,128], index: 0, kind: input, shape index: {}]
  %s1 = inlined_call_operand.hbm [shape: bf16[128,128], index: 1, kind: input, shape index: {}]
  %s2 = inlined_call_operand.vmem [shape: f32[1,128], index: 2, kind: input, shape index: {}]
  %s3 = inlined_call_operand.hbm [shape: bf16[128,128], index: 3, kind: output, shape index: {}]
  %s4 = sld [smem:[#allocation0]]
  $region30: #{tpu_custom_call.1} parent=0
    _
  %s6 = ssub.s32 1, %s4
  %s7 = scalar_select 0, %s6, %s4
  $region1: #{tpu_custom_call.1} parent=0
    #allocation2 [shape = 'u8[32768]{0}', space=vmem, size = 0x8000, scoped, tag = 'input window, operand 0, single buffered']
    #allocation3 [shape = 's32[1]{0}', space=sflag, size = 0x4, scoped, tag = 'scoped memory for tpu_custom_call.1']
    #allocation4 [shape = 's32[1]{0}', space=sflag, size = 0x4, scoped, tag = 'scoped memory for tpu_custom_call.1']
    #allocation5 [shape = 'u8[32768]{0}', space=vmem, size = 0x8000, scoped, tag = 'input window, operand 1, single buffered']
    #allocation6 [shape = 's32[1]{0}', space=sflag, size = 0x4, scoped, tag = 'scoped memory for tpu_custom_call.1']
    #allocation7 [shape = 'u8[32768]{0}', space=vmem, size = 0x8000, scoped, tag = 'output window, operand 0, single buffered']
    %8 = vsyncpa [#allocation3], 0
    %9 = vsyncpa [#allocation6], 0
    %10 = vsyncpa [#allocation4], 0
    // Predicated region
    $region2: #{tpu_custom_call.1} parent=1 // pred_check
      _
    $region3: #{tpu_custom_call.1} parent=1 // pred_check_branch
      %12 = sbr.rel (0) target = $region5
    $region4: #{tpu_custom_call.1} parent=1 // pred_region
      %s14 = ssub.s32 1024, 1024
      %15 = vsyncadd [#allocation3], %s14
      %s16 = sshll.u32 [#allocation2], 4
      %s17 = int_to_ptr.vmem [resolvable:$true] %s16
      %22 = dma.hbm_to_vmem [thread:$0]  %s0, 1024, %s17, [#allocation3], 64, 64, 4
    $region5: #{tpu_custom_call.1} parent=1 // pred_fallthru
      _
    // Predicated region
    $region6: #{tpu_custom_call.1} parent=1 // pred_check
      _
    $region7: #{tpu_custom_call.1} parent=1 // pred_check_branch
      %24 = sbr.rel (0) target = $region9
    $region8: #{tpu_custom_call.1} parent=1 // pred_region
      %s26 = ssub.s32 1024, 1024
      %27 = vsyncadd [#allocation6], %s26
      %s28 = sshll.u32 [#allocation5], 4
      %s29 = int_to_ptr.vmem [resolvable:$true] %s28
      %34 = dma.hbm_to_vmem [thread:$0]  %s1, 1024, %s29, [#allocation6], 64, 64, 4
    $region9: #{tpu_custom_call.1} parent=1 // pred_fallthru
      _
    // Predicated region
    $region10: #{tpu_custom_call.1} parent=1 // pred_check
      _
    $region11: #{tpu_custom_call.1} parent=1 // pred_check_branch
      %36 = sbr.rel (0) target = $region13
    $region12: #{tpu_custom_call.1} parent=1 // pred_region
      _
    $region13: #{tpu_custom_call.1} parent=1 // pred_fallthru
      _
    // Predicated region
    $region14: #{tpu_custom_call.1} parent=1 // pred_check
      _
    $region15: #{tpu_custom_call.1} parent=1 // pred_check_branch
      %38 = sbr.rel (0) target = $region17
    $region16: #{tpu_custom_call.1} parent=1 // pred_region
      %39 = dma.done [#allocation3], 1024
    $region17: #{tpu_custom_call.1} parent=1 // pred_fallthru
      _
    // Predicated region
    $region18: #{tpu_custom_call.1} parent=1 // pred_check
      _
    $region19: #{tpu_custom_call.1} parent=1 // pred_check_branch
      %41 = sbr.rel (0) target = $region21
    $region20: #{tpu_custom_call.1} parent=1 // pred_region
      %42 = dma.done [#allocation6], 1024
    $region21: #{tpu_custom_call.1} parent=1 // pred_fallthru
      _
    %v44 = vld [vmem:[#allocation2] sm:$0xf]
    %v45 = vld [vmem:[#allocation2 + $0x4] sm:$0xf]
    %v46 = vld [vmem:[#allocation2 + $0x8] sm:$0xf]
    %v47 = vld [vmem:[#allocation2 + $0xc] sm:$0xf]
    %v48 = vld [vmem:[#allocation2 + $0x10] sm:$0xf]
    %v49 = vld [vmem:[#allocation2 + $0x14] sm:$0xf]
    %v50 = vld [vmem:[#allocation2 + $0x18] sm:$0xf]
    %v51 = vld [vmem:[#allocation2 + $0x1c] sm:$0xf]
    %v52 = vld [vmem:[#allocation2 + $0x20] sm:$0xf]
    %v53 = vld [vmem:[#allocation2 + $0x24] sm:$0xf]
    %v54 = vld [vmem:[#allocation2 + $0x28] sm:$0xf]
    %v55 = vld [vmem:[#allocation2 + $0x2c] sm:$0xf]
    %v56 = vld [vmem:[#allocation2 + $0x30] sm:$0xf]
    %v57 = vld [vmem:[#allocation2 + $0x34] sm:$0xf]
    %v58 = vld [vmem:[#allocation2 + $0x38] sm:$0xf]
    %v59 = vld [vmem:[#allocation2 + $0x3c] sm:$0xf]
    %v60 = vld [vmem:[#allocation5] sm:$0xf]
    %v61 = vld [vmem:[#allocation5 + $0x4] sm:$0xf]
    %v62 = vld [vmem:[#allocation5 + $0x8] sm:$0xf]
    %v63 = vld [vmem:[#allocation5 + $0xc] sm:$0xf]
    %v64 = vld [vmem:[#allocation5 + $0x10] sm:$0xf]
    %v65 = vld [vmem:[#allocation5 + $0x14] sm:$0xf]
    %v66 = vld [vmem:[#allocation5 + $0x18] sm:$0xf]
    %v67 = vld [vmem:[#allocation5 + $0x1c] sm:$0xf]
    %v68 = vld [vmem:[#allocation5 + $0x20] sm:$0xf]
    %v69 = vld [vmem:[#allocation5 + $0x24] sm:$0xf]
    %v70 = vld [vmem:[#allocation5 + $0x28] sm:$0xf]
    %v71 = vld [vmem:[#allocation5 + $0x2c] sm:$0xf]
    %v72 = vld [vmem:[#allocation5 + $0x30] sm:$0xf]
    %v73 = vld [vmem:[#allocation5 + $0x34] sm:$0xf]
    %v74 = vld [vmem:[#allocation5 + $0x38] sm:$0xf]
    %v75 = vld [vmem:[#allocation5 + $0x3c] sm:$0xf]
    %v76 = vld [vmem:[%s2] sm:$0x1]
    %v78 = vlaneseq
    %v79 = vshrl.u32 %v78, 7
    %v80 = vsub.s32 0, %v79
    %v81 = vrot.slane %v76, %v80
    %v99 = vunpack.c.l.b16 %v44
    %v100 = vunpack.c.l.b16 %v45
    %v101 = vunpack.c.l.b16 %v46
    %v102 = vunpack.c.l.b16 %v47
    %v103 = vunpack.c.l.b16 %v48
    %v104 = vunpack.c.l.b16 %v49
    %v105 = vunpack.c.l.b16 %v50
    %v106 = vunpack.c.l.b16 %v51
    %v107 = vunpack.c.l.b16 %v52
    %v108 = vunpack.c.l.b16 %v53
    %v109 = vunpack.c.l.b16 %v54
    %v110 = vunpack.c.l.b16 %v55
    %v111 = vunpack.c.l.b16 %v56
    %v112 = vunpack.c.l.b16 %v57
    %v113 = vunpack.c.l.b16 %v58
    %v114 = vunpack.c.l.b16 %v59
    %v115 = vpack.c.b16 %v100, %v99
    %v116 = vpack.c.b16 %v102, %v101
    %v117 = vpack.c.b16 %v104, %v103
    %v118 = vpack.c.b16 %v106, %v105
    %v119 = vpack.c.b16 %v108, %v107
    %v120 = vpack.c.b16 %v110, %v109
    %v121 = vpack.c.b16 %v112, %v111
    %v122 = vpack.c.b16 %v114, %v113
    %v147 = vunpack.c.l.b16 %v60
    %v148 = vunpack.c.l.b16 %v61
    %v149 = vunpack.c.l.b16 %v62
    %v150 = vunpack.c.l.b16 %v63
    %v151 = vunpack.c.l.b16 %v64
    %v152 = vunpack.c.l.b16 %v65
    %v153 = vunpack.c.l.b16 %v66
    %v154 = vunpack.c.l.b16 %v67
    %v155 = vunpack.c.l.b16 %v68
    %v156 = vunpack.c.l.b16 %v69
    %v157 = vunpack.c.l.b16 %v70
    %v158 = vunpack.c.l.b16 %v71
    %v159 = vunpack.c.l.b16 %v72
    %v160 = vunpack.c.l.b16 %v73
    %v161 = vunpack.c.l.b16 %v74
    %v162 = vunpack.c.l.b16 %v75
    %v163 = vpack.c.b16 %v148, %v147
    %v164 = vpack.c.b16 %v150, %v149
    %v165 = vpack.c.b16 %v152, %v151
    %v166 = vpack.c.b16 %v154, %v153
    %v167 = vpack.c.b16 %v156, %v155
    %v168 = vpack.c.b16 %v158, %v157
    %v169 = vpack.c.b16 %v160, %v159
    %v170 = vpack.c.b16 %v162, %v161
    %179 = vmatprep.subr.bf16.mxu0 0
    %180 = vmatpush1.bf16.msra.mxu0 %v163
    %181 = vmatprep.subr.bf16.mxu0 0
    %182 = vmatpush1.bf16.msra.mxu0 %v164
    %183 = vmatprep.subr.bf16.mxu0 0
    %184 = vmatpush1.bf16.msra.mxu0 %v165
    %185 = vmatprep.subr.bf16.mxu0 0
    %186 = vmatpush1.bf16.msra.mxu0 %v166
    %187 = vmatprep.subr.bf16.mxu0 0
    %188 = vmatpush1.bf16.msra.mxu0 %v167
    %189 = vmatprep.subr.bf16.mxu0 0
    %190 = vmatpush1.bf16.msra.mxu0 %v168
    %191 = vmatprep.subr.bf16.mxu0 0
    %192 = vmatpush1.bf16.msra.mxu0 %v169
    %193 = vmatprep.subr.bf16.mxu0 0
    %194 = vmatpush1.bf16.msra.mxu0 %v170
    %195 = vmatprep.subr.bf16.mxu0 0
    %196 = vmatpush1.bf16.msra.mxu0 0
    %197 = vmatprep.subr.bf16.mxu0 0
    %198 = vmatpush1.bf16.msra.mxu0 0
    %199 = vmatprep.subr.bf16.mxu0 0
    %200 = vmatpush1.bf16.msra.mxu0 0
    %201 = vmatprep.subr.bf16.mxu0 0
    %202 = vmatpush1.bf16.msra.mxu0 0
    %203 = vmatprep.subr.bf16.mxu0 0
    %204 = vmatpush1.bf16.msra.mxu0 0
    %205 = vmatprep.subr.bf16.mxu0 0
    %206 = vmatpush1.bf16.msra.mxu0 0
    %207 = vmatprep.subr.bf16.mxu0 0
    %208 = vmatpush1.bf16.msra.mxu0 0
    %209 = vmatprep.subr.bf16.mxu0 0
    %210 = vmatpush1.bf16.msra.mxu0 0
    %211 = vmatprep.mubr.bf16.mxu0 0
    %212 = vmatmul.mubr.bf16.gmra.mrb[0].mxu0 %v115
    %v213 = vpop.f32.mrb[0].mxu0
    %v214 = vadd.f32 %v81, %v213
    %v215 = vpop.f32.mrb[0].mxu0
    %v216 = vpop.f32.mrb[0].mxu0
    %v217 = vadd.f32 %v81, %v216
    %v218 = vpop.f32.mrb[0].mxu0
    %219 = vmatprep.mubr.bf16.mxu0 0
    %220 = vmatmul.mubr.bf16.gmra.mrb[0].mxu0 %v116
    %v221 = vpop.f32.mrb[0].mxu0
    %v222 = vadd.f32 %v81, %v221
    %v223 = vpop.f32.mrb[0].mxu0
    %v224 = vpop.f32.mrb[0].mxu0
    %v225 = vadd.f32 %v81, %v224
    %v226 = vpop.f32.mrb[0].mxu0
    %227 = vmatprep.mubr.bf16.mxu0 0
    %228 = vmatmul.mubr.bf16.gmra.mrb[0].mxu0 %v117
    %v229 = vpop.f32.mrb[0].mxu0
    %v230 = vadd.f32 %v81, %v229
    %v231 = vpop.f32.mrb[0].mxu0
    %v232 = vpop.f32.mrb[0].mxu0
    %v233 = vadd.f32 %v81, %v232
    %v234 = vpop.f32.mrb[0].mxu0
    %235 = vmatprep.mubr.bf16.mxu0 0
    %236 = vmatmul.mubr.bf16.gmra.mrb[0].mxu0 %v118
    %v237 = vpop.f32.mrb[0].mxu0
    %v238 = vadd.f32 %v81, %v237
    %v239 = vpop.f32.mrb[0].mxu0
    %v240 = vpop.f32.mrb[0].mxu0
    %v241 = vadd.f32 %v81, %v240
    %v242 = vpop.f32.mrb[0].mxu0
    %243 = vmatprep.mubr.bf16.mxu0 0
    %244 = vmatmul.mubr.bf16.gmra.mrb[0].mxu0 %v119
    %v245 = vpop.f32.mrb[0].mxu0
    %v246 = vadd.f32 %v81, %v245
    %v247 = vpop.f32.mrb[0].mxu0
    %v248 = vpop.f32.mrb[0].mxu0
    %v249 = vadd.f32 %v81, %v248
    %v250 = vpop.f32.mrb[0].mxu0
    %251 = vmatprep.mubr.bf16.mxu0 0
    %252 = vmatmul.mubr.bf16.gmra.mrb[0].mxu0 %v120
    %v253 = vpop.f32.mrb[0].mxu0
    %v254 = vadd.f32 %v81, %v253
    %v255 = vpop.f32.mrb[0].mxu0
    %v256 = vpop.f32.mrb[0].mxu0
    %v257 = vadd.f32 %v81, %v256
    %v258 = vpop.f32.mrb[0].mxu0
    %259 = vmatprep.mubr.bf16.mxu0 0
    %260 = vmatmul.mubr.bf16.gmra.mrb[0].mxu0 %v121
    %v261 = vpop.f32.mrb[0].mxu0
    %v262 = vadd.f32 %v81, %v261
    %v263 = vpop.f32.mrb[0].mxu0
    %v264 = vpop.f32.mrb[0].mxu0
    %v265 = vadd.f32 %v81, %v264
    %v266 = vpop.f32.mrb[0].mxu0
    %267 = vmatprep.mubr.bf16.mxu0 0
    %268 = vmatmul.mubr.bf16.gmra.mrb[0].mxu0 %v122
    %v269 = vpop.f32.mrb[0].mxu0
    %v270 = vadd.f32 %v81, %v269
    %v271 = vpop.f32.mrb[0].mxu0
    %v272 = vpop.f32.mrb[0].mxu0
    %v273 = vadd.f32 %v81, %v272
    %v274 = vpop.f32.mrb[0].mxu0
    %275 = vdwg.mxu0
    %v276 = vmax.f32 %v214, 0.0
    %v277 = vmax.f32 %v217, 0.0
    %v278 = vmax.f32 %v222, 0.0
    %v279 = vmax.f32 %v225, 0.0
    %v280 = vmax.f32 %v230, 0.0
    %v281 = vmax.f32 %v233, 0.0
    %v282 = vmax.f32 %v238, 0.0
    %v283 = vmax.f32 %v241, 0.0
    %v284 = vmax.f32 %v246, 0.0
    %v285 = vmax.f32 %v249, 0.0
    %v286 = vmax.f32 %v254, 0.0
    %v287 = vmax.f32 %v257, 0.0
    %v288 = vmax.f32 %v262, 0.0
    %v289 = vmax.f32 %v265, 0.0
    %v290 = vmax.f32 %v270, 0.0
    %v291 = vmax.f32 %v273, 0.0
    %v292 = vpack.c.bf16 %v277, %v276
    %v293 = vpack.c.bf16 %v279, %v278
    %v294 = vpack.c.bf16 %v281, %v280
    %v295 = vpack.c.bf16 %v283, %v282
    %v296 = vpack.c.bf16 %v285, %v284
    %v297 = vpack.c.bf16 %v287, %v286
    %v298 = vpack.c.bf16 %v289, %v288
    %v299 = vpack.c.bf16 %v291, %v290
    %v308 = vunpack.c.l.b16 %v292
    %v309 = vunpack.c.h.b16 %v292
    %v310 = vunpack.c.l.b16 %v293
    %v311 = vunpack.c.h.b16 %v293
    %v312 = vunpack.c.l.b16 %v294
    %v313 = vunpack.c.h.b16 %v294
    %v314 = vunpack.c.l.b16 %v295
    %v315 = vunpack.c.h.b16 %v295
    %v316 = vunpack.c.l.b16 %v296
    %v317 = vunpack.c.h.b16 %v296
    %v318 = vunpack.c.l.b16 %v297
    %v319 = vunpack.c.h.b16 %v297
    %v320 = vunpack.c.l.b16 %v298
    %v321 = vunpack.c.h.b16 %v298
    %v322 = vunpack.c.l.b16 %v299
    %v323 = vunpack.c.h.b16 %v299
    %v324 = vpack.c.b16 %v308, %v308
    %v325 = vpack.c.b16 %v309, %v309
    %v326 = vpack.c.b16 %v310, %v310
    %v327 = vpack.c.b16 %v311, %v311
    %v328 = vpack.c.b16 %v312, %v312
    %v329 = vpack.c.b16 %v313, %v313
    %v330 = vpack.c.b16 %v314, %v314
    %v331 = vpack.c.b16 %v315, %v315
    %v332 = vpack.c.b16 %v316, %v316
    %v333 = vpack.c.b16 %v317, %v317
    %v334 = vpack.c.b16 %v318, %v318
    %v335 = vpack.c.b16 %v319, %v319
    %v336 = vpack.c.b16 %v320, %v320
    %v337 = vpack.c.b16 %v321, %v321
    %v338 = vpack.c.b16 %v322, %v322
    %v339 = vpack.c.b16 %v323, %v323
    %356 = vst [vmem:[#allocation7] sm:$0xf] %v324
    %357 = vst [vmem:[#allocation7 + $0x4] sm:$0xf] %v325
    %358 = vst [vmem:[#allocation7 + $0x8] sm:$0xf] %v326
    %359 = vst [vmem:[#allocation7 + $0xc] sm:$0xf] %v327
    %360 = vst [vmem:[#allocation7 + $0x10] sm:$0xf] %v328
    %361 = vst [vmem:[#allocation7 + $0x14] sm:$0xf] %v329
    %362 = vst [vmem:[#allocation7 + $0x18] sm:$0xf] %v330
    %363 = vst [vmem:[#allocation7 + $0x1c] sm:$0xf] %v331
    %364 = vst [vmem:[#allocation7 + $0x20] sm:$0xf] %v332
    %365 = vst [vmem:[#allocation7 + $0x24] sm:$0xf] %v333
    %366 = vst [vmem:[#allocation7 + $0x28] sm:$0xf] %v334
    %367 = vst [vmem:[#allocation7 + $0x2c] sm:$0xf] %v335
    %368 = vst [vmem:[#allocation7 + $0x30] sm:$0xf] %v336
    %369 = vst [vmem:[#allocation7 + $0x34] sm:$0xf] %v337
    %370 = vst [vmem:[#allocation7 + $0x38] sm:$0xf] %v338
    %371 = vst [vmem:[#allocation7 + $0x3c] sm:$0xf] %v339
    // Predicated region
    $region22: #{tpu_custom_call.1} parent=1 // pred_check
      _
    $region23: #{tpu_custom_call.1} parent=1 // pred_check_branch
      %373 = sbr.rel (0) target = $region25
    $region24: #{tpu_custom_call.1} parent=1 // pred_region
      %s375 = ssub.s32 1024, 1024
      %376 = vsyncadd [#allocation4], %s375
      %s377 = sshll.u32 [#allocation7], 4
      %s378 = int_to_ptr.vmem [resolvable:$true] %s377
      %383 = dma.vmem_to_hbm [thread:$0]  %s378, 1024, %s3, [#allocation4], 64, 64, 4
    $region25: #{tpu_custom_call.1} parent=1 // pred_fallthru
      _
    // Predicated region
    $region26: #{tpu_custom_call.1} parent=1 // pred_check
      _
    $region27: #{tpu_custom_call.1} parent=1 // pred_check_branch
      %385 = sbr.rel (0) target = $region29
    $region28: #{tpu_custom_call.1} parent=1 // pred_region
      %386 = dma.done [#allocation4], 1024
    $region29: #{tpu_custom_call.1} parent=1 // pred_fallthru
      _
    %387 = vsyncpa [#allocation3], 1
    %388 = vsyncpa [#allocation6], 1
    %389 = vsyncpa [#allocation4], 1

</llo_original>
